<compile_context>
chip_gen: v7x
topology: tpu7x:2x2x1
jax: 0.10.0
libtpu: 0.0.40
codegen_flags: <defaults>
</compile_context>

<pallas_src>
import jax
import jax.numpy as jnp
from jax.experimental import pallas as pl
from jax.experimental.pallas import tpu as pltpu

LANE = 128      # vreg lane width
SUBLANE = 8     # vreg sublane depth

# Tiled-fallback tile sizes (adaptively shrunk if padded dims don't divide).
_TM = 256
_TN_CANDS = (512, 256, 128)
_TK_CANDS = (512, 256, 128)

# Dispatch thresholds (bytes).
_SMALL_BUDGET = 6 * 1024 * 1024        # whole-array grid-less path
_RESIDENT_W_BUDGET = 12 * 1024 * 1024  # bf16 W kept resident in VMEM
                                       # (2x buffered + tiles still < 32 MiB
                                       #  scoped default; safe on v7x 64 MiB)


def _round_up(x: int, m: int) -> int:
    return (x + m - 1) // m * m


def _largest_divisor_tile(dim: int, candidates) -> int:
    for c in candidates:
        if dim % c == 0:
            return c
    return candidates[-1]


# ----------------------------------------------------------------------------
# Kernel bodies.
# ----------------------------------------------------------------------------
def _linear_block_kernel(x_ref, w_ref, b_ref, o_ref):
    """One MXU pass over the (whole or M-tiled) block; bf16 in, f32 accumulate."""
    acc = jnp.dot(x_ref[...], w_ref[...], preferred_element_type=jnp.float32)
    o_ref[...] = (acc + b_ref[...]).astype(o_ref.dtype)


def _linear_tiled_kernel(x_ref, w_ref, b_ref, o_ref, acc_ref):
    k = pl.program_id(2)

    @pl.when(k == 0)
    def _():
        # Bias folded into the accumulator init -> epilogue is a plain cast.
        acc_ref[...] = jnp.broadcast_to(b_ref[...], acc_ref.shape)

    acc_ref[...] += jnp.dot(x_ref[...], w_ref[...],
                            preferred_element_type=jnp.float32)

    @pl.when(k == pl.num_programs(2) - 1)
    def _():
        o_ref[...] = acc_ref[...].astype(o_ref.dtype)


# ----------------------------------------------------------------------------
# pallas_call wrappers (three paths).
# ----------------------------------------------------------------------------
def _linear_small(x, w_t, b_row, out_dtype):
    m, _ = x.shape
    n = w_t.shape[1]
    return pl.pallas_call(
        _linear_block_kernel,
        out_shape=jax.ShapeDtypeStruct((m, n), out_dtype),
        in_specs=[
            pl.BlockSpec(memory_space=pltpu.MemorySpace.VMEM),
            pl.BlockSpec(memory_space=pltpu.MemorySpace.VMEM),
            pl.BlockSpec(memory_space=pltpu.MemorySpace.VMEM),
        ],
        out_specs=pl.BlockSpec(memory_space=pltpu.MemorySpace.VMEM),
    )(x, w_t, b_row)


def _linear_resident(x, w_t, b_row, out_dtype, *, tm=_TM):
    m, kdim = x.shape
    n = w_t.shape[1]
    return pl.pallas_call(
        _linear_block_kernel,
        out_shape=jax.ShapeDtypeStruct((m, n), out_dtype),
        grid=(m // tm,),
        in_specs=[
            pl.BlockSpec((tm, kdim), lambda i: (i, 0)),
            # Constant block index -> W is DMAed once and stays resident.
            pl.BlockSpec((kdim, n), lambda i: (0, 0)),
            pl.BlockSpec((1, n), lambda i: (0, 0)),
        ],
        out_specs=pl.BlockSpec((tm, n), lambda i: (i, 0)),
        compiler_params=pltpu.CompilerParams(
            dimension_semantics=("parallel",),
            vmem_limit_bytes=48 * 1024 * 1024,
        ),
    )(x, w_t, b_row)


def _linear_tiled(x, w_t, b_row, out_dtype, *, tm, tn, tk):
    m, kdim = x.shape
    n = w_t.shape[1]
    return pl.pallas_call(
        _linear_tiled_kernel,
        out_shape=jax.ShapeDtypeStruct((m, n), out_dtype),
        grid=(m // tm, n // tn, kdim // tk),
        in_specs=[
            pl.BlockSpec((tm, tk), lambda i, j, k: (i, k)),
            pl.BlockSpec((tk, tn), lambda i, j, k: (k, j)),
            pl.BlockSpec((1, tn), lambda i, j, k: (0, j)),
        ],
        out_specs=pl.BlockSpec((tm, tn), lambda i, j, k: (i, j)),
        scratch_shapes=[pltpu.VMEM((tm, tn), jnp.float32)],
        compiler_params=pltpu.CompilerParams(
            dimension_semantics=("parallel", "parallel", "arbitrary"),
            vmem_limit_bytes=32 * 1024 * 1024,
        ),
    )(x, w_t, b_row)


# ----------------------------------------------------------------------------
# The wrapped "original model": Linear(W, b) with bf16 lane-dense padded params.
# ----------------------------------------------------------------------------
def make_linear(w, b, *, compute_dtype=jnp.bfloat16, force_path=None):
    """w: [out_features, in_features] (torch.nn.Linear layout), b: [out_features]."""
    w = jnp.asarray(w)
    b = jnp.asarray(b)
    out_f, in_f = w.shape
    n_pad = _round_up(out_f, LANE)   # lane-dense output, full MXU columns
    k_pad = _round_up(in_f, LANE)    # K padded once -> tiled paths always legal

    w_t = jnp.zeros((k_pad, n_pad), compute_dtype)
    w_t = w_t.at[:in_f, :out_f].set(w.T.astype(compute_dtype))
    b_row = jnp.zeros((1, n_pad), jnp.float32).at[0, :out_f].set(
        b.astype(jnp.float32))

    def forward(x):
        lead = x.shape[:-1]
        out_dtype = x.dtype
        x2 = x.reshape(-1, x.shape[-1]).astype(compute_dtype)
        m = x2.shape[0]
        if in_f != k_pad:
            x2 = jnp.pad(x2, ((0, 0), (0, k_pad - in_f)))

        # VMEM-footprint dispatch (not FLOP based).
        m8 = _round_up(max(m, 1), SUBLANE)
        small_bytes = ((m8 * k_pad + k_pad * n_pad) * 2   # bf16 x, W
                       + m8 * n_pad * 4                   # f32-ish output
                       + n_pad * 4)                       # bias
        w_bytes = k_pad * n_pad * 2
        if force_path is not None:
            path = force_path
        elif small_bytes <= _SMALL_BUDGET:
            path = "small"
        elif w_bytes <= _RESIDENT_W_BUDGET:
            path = "resident"
        else:
            path = "tiled"

        m_pad = m8 if path == "small" else _round_up(m, _TM)
        if m_pad != m:
            x2 = jnp.pad(x2, ((0, m_pad - m), (0, 0)))

        if path == "small":
            out_p = _linear_small(x2, w_t, b_row, out_dtype)
        elif path == "resident":
            out_p = _linear_resident(x2, w_t, b_row, out_dtype)
        else:
            tn = _largest_divisor_tile(n_pad, _TN_CANDS)
            tk = _largest_divisor_tile(k_pad, _TK_CANDS)
            out_p = _linear_tiled(x2, w_t, b_row, out_dtype, tm=_TM, tn=tn, tk=tk)

        return out_p[:m, :out_f].reshape(*lead, out_f)

    return forward


class BaseInjectionJAX:
    """Mirror of fickling's BaseInjection: wraps a model, forwards to it."""

    def __init__(self, original_model, payload: str):
        self.original_model = original_model
        # TODO(synk): __reduce__ / pickle-payload behavior is pickle-time only
        # and has no runtime compute semantics; nothing to express in Pallas.
        self.payload = payload

    def __call__(self, *args, **kwargs):
        return self.original_model(*args, **kwargs)


if __name__ == "__main__":
    def ref_linear(x, w, b):
        # Reference with the same bf16-rounded operands, f32 accumulation.
        xb = x.astype(jnp.bfloat16).astype(jnp.float32)
        wb = w.astype(jnp.bfloat16).astype(jnp.float32)
        return jnp.dot(xb, wb.T, precision="highest") + b

    # ---- 1) Small shapes: grid-less whole-array VMEM path (default dispatch).
    batch, in_f, out_f = 8, 32, 32
    kx, kw, kb = jax.random.split(jax.random.PRNGKey(0), 3)
    x = jax.random.normal(kx, (batch, in_f), dtype=jnp.float32)
    w = jax.random.normal(kw, (out_f, in_f), dtype=jnp.float32) * 0.1
    b = jax.random.normal(kb, (out_f,), dtype=jnp.float32) * 0.1
    model = BaseInjectionJAX(make_linear(w, b),
                             payload="print('payload ignored')")
    out = jax.block_until_ready(model(x))
    assert out.shape == (batch, out_f)
    assert jnp.allclose(out, ref_linear(x, w, b), atol=5e-3, rtol=5e-3)

    # ---- 2) Resident-weight path (grid over M, W DMAed once), with ragged
    #         batch / in / out dims exercising the M/K/N zero-padding.
    batch2, in_f2, out_f2 = 500, 700, 600
    kx2, kw2, kb2 = jax.random.split(jax.random.PRNGKey(1), 3)
    x2 = jax.random.normal(kx2, (batch2, in_f2), dtype=jnp.float32)
    w2 = jax.random.normal(kw2, (out_f2, in_f2), dtype=jnp.float32) * 0.05
    b2 = jax.random.normal(kb2, (out_f2,), dtype=jnp.float32) * 0.1
    model2 = BaseInjectionJAX(make_linear(w2, b2, force_path="resident"),
                              payload="print('payload ignored')")
    out2 = jax.block_until_ready(model2(x2))
    assert out2.shape == (batch2, out_f2)
    assert jnp.allclose(out2, ref_linear(x2, w2, b2), atol=5e-3, rtol=5e-3)

    # ---- 3) Full (M, N, K) tiled path: f32 accumulator, bias-folded init.
    batch3, in_f3, out_f3 = 512, 1024, 1024
    kx3, kw3, kb3 = jax.random.split(jax.random.PRNGKey(2), 3)
    x3 = jax.random.normal(kx3, (batch3, in_f3), dtype=jnp.float32)
    w3 = jax.random.normal(kw3, (out_f3, in_f3), dtype=jnp.float32) * 0.05
    b3 = jax.random.normal(kb3, (out_f3,), dtype=jnp.float32) * 0.1
    model3 = BaseInjectionJAX(make_linear(w3, b3, force_path="tiled"),
                              payload="print('payload ignored')")
    out3 = jax.block_until_ready(model3(x3))
    assert out3.shape == (batch3, out_f3)
    assert jnp.allclose(out3, ref_linear(x3, w3, b3), atol=5e-3, rtol=5e-3)

    print("KERNEL_OK")
</pallas_src>

<mosaic_0001>
module attributes {stable_mosaic.version = 11 : i64} {
  func.func @_linear_block_kernel(%arg0: memref<8x128xbf16, #tpu.memory_space<vmem>>, %arg1: memref<128x128xbf16, #tpu.memory_space<vmem>>, %arg2: memref<1x128xf32, #tpu.memory_space<vmem>>, %arg3: memref<8x128xf32, #tpu.memory_space<vmem>>) attributes {dimension_semantics = [], scalar_prefetch = 0 : i64, scratch_operands = 0 : i64, tpu.core_type = #tpu.core_type<tc>} {
    %c0 = arith.constant 0 : index
    %c0_0 = arith.constant 0 : index
    %0 = vector.load %arg0[%c0, %c0_0] : memref<8x128xbf16, #tpu.memory_space<vmem>>, vector<8x128xbf16>
    %c0_1 = arith.constant 0 : index
    %c0_2 = arith.constant 0 : index
    %1 = vector.load %arg1[%c0_1, %c0_2] : memref<128x128xbf16, #tpu.memory_space<vmem>>, vector<128x128xbf16>
    %cst = arith.constant dense<0.000000e+00> : vector<8x128xf32>
    %2 = tpu.matmul %0, %1, %cst {dimension_numbers = #tpu.dot_dimension_numbers<[1], [0], [0], [1], [0, 0, 1, 1], [], []>} : vector<8x128xbf16>, vector<128x128xbf16>, vector<8x128xf32> -> vector<8x128xf32>
    %c0_3 = arith.constant 0 : index
    %c0_4 = arith.constant 0 : index
    %3 = vector.load %arg2[%c0_3, %c0_4] : memref<1x128xf32, #tpu.memory_space<vmem>>, vector<1x128xf32>
    %4 = vector.broadcast %3 : vector<1x128xf32> to vector<8x128xf32>
    %5 = arith.addf %2, %4 : vector<8x128xf32>
    %c0_5 = arith.constant 0 : index
    %c0_6 = arith.constant 0 : index
    %6 = vector.load %arg3[%c0_5, %c0_6] : memref<8x128xf32, #tpu.memory_space<vmem>>, vector<8x128xf32>
    tpu.vector_store %arg3[%c0_5, %c0_6], %5 {strides = array<i32>} : memref<8x128xf32, #tpu.memory_space<vmem>>, vector<8x128xf32>,
    return
  }
}

</mosaic_0001>

<llo_original>
// kernel: tpu_custom_call.1
$region0: #{tpu_custom_call.1}
  #allocation0 [shape = 'u32[]', space=smem, size = 0x4, offset = 0x4, fixed_abs, tag = 'smem constant byte address 0x4 - core index']
  #allocation1 [shape = 'u32[144,128]{1,0:T(1,128)}', space=vmem, size = 0x12000, scoped, tag = 'internal scratch']
  %s0 = inlined_call_operand.hbm [shape: bf16[8,128], index: 0, kind: input, shape index: {}]
  %s1 = inlined_call_operand.hbm [shape: bf16[128,128], index: 1, kind: input, shape index: {}]
  %s2 = inlined_call_operand.vmem [shape: f32[1,128], index: 2, kind: input, shape index: {}]
  %s3 = inlined_call_operand.hbm [shape: f32[8,128], index: 3, kind: output, shape index: {}]
  %s4 = sld [smem:[#allocation0]]
  $region30: #{tpu_custom_call.1} parent=0
    _
  %s6 = ssub.s32 1, %s4
  %s7 = scalar_select 0, %s6, %s4
  $region1: #{tpu_custom_call.1} parent=0
    #allocation2 [shape = 'u8[2048]{0}', space=vmem, size = 0x800, scoped, tag = 'input window, operand 0, single buffered']
    #allocation3 [shape = 's32[1]{0}', space=sflag, size = 0x4, scoped, tag = 'scoped memory for tpu_custom_call.1']
    #allocation4 [shape = 's32[1]{0}', space=sflag, size = 0x4, scoped, tag = 'scoped memory for tpu_custom_call.1']
    #allocation5 [shape = 'u8[32768]{0}', space=vmem, size = 0x8000, scoped, tag = 'input window, operand 1, single buffered']
    #allocation6 [shape = 's32[1]{0}', space=sflag, size = 0x4, scoped, tag = 'scoped memory for tpu_custom_call.1']
    #allocation7 [shape = 'u8[4096]{0}', space=vmem, size = 0x1000, scoped, tag = 'output window, operand 0, single buffered']
    %8 = vsyncpa [#allocation3], 0
    %9 = vsyncpa [#allocation6], 0
    %10 = vsyncpa [#allocation4], 0
    // Predicated region
    $region2: #{tpu_custom_call.1} parent=1 // pred_check
      _
    $region3: #{tpu_custom_call.1} parent=1 // pred_check_branch
      %12 = sbr.rel (0) target = $region5
    $region4: #{tpu_custom_call.1} parent=1 // pred_region
      %s14 = ssub.s32 64, 64
      %15 = vsyncadd [#allocation3], %s14
      %s17 = sshll.u32 [#allocation2], 4
      %s18 = int_to_ptr.vmem [resolvable:$true] %s17
      %20 = dma.hbm_to_vmem [thread:$0]  %s0, 64, %s18, [#allocation3]
    $region5: #{tpu_custom_call.1} parent=1 // pred_fallthru
      _
    // Predicated region
    $region6: #{tpu_custom_call.1} parent=1 // pred_check
      _
    $region7: #{tpu_custom_call.1} parent=1 // pred_check_branch
      %22 = sbr.rel (0) target = $region9
    $region8: #{tpu_custom_call.1} parent=1 // pred_region
      %s24 = ssub.s32 1024, 1024
      %25 = vsyncadd [#allocation6], %s24
      %s26 = sshll.u32 [#allocation5], 4
      %s27 = int_to_ptr.vmem [resolvable:$true] %s26
      %32 = dma.hbm_to_vmem [thread:$0]  %s1, 1024, %s27, [#allocation6], 64, 64, 4
    $region9: #{tpu_custom_call.1} parent=1 // pred_fallthru
      _
    // Predicated region
    $region10: #{tpu_custom_call.1} parent=1 // pred_check
      _
    $region11: #{tpu_custom_call.1} parent=1 // pred_check_branch
      %34 = sbr.rel (0) target = $region13
    $region12: #{tpu_custom_call.1} parent=1 // pred_region
      _
    $region13: #{tpu_custom_call.1} parent=1 // pred_fallthru
      _
    // Predicated region
    $region14: #{tpu_custom_call.1} parent=1 // pred_check
      _
    $region15: #{tpu_custom_call.1} parent=1 // pred_check_branch
      %36 = sbr.rel (0) target = $region17
    $region16: #{tpu_custom_call.1} parent=1 // pred_region
      %37 = dma.done [#allocation3], 64
    $region17: #{tpu_custom_call.1} parent=1 // pred_fallthru
      _
    // Predicated region
    $region18: #{tpu_custom_call.1} parent=1 // pred_check
      _
    $region19: #{tpu_custom_call.1} parent=1 // pred_check_branch
      %39 = sbr.rel (0) target = $region21
    $region20: #{tpu_custom_call.1} parent=1 // pred_region
      %40 = dma.done [#allocation6], 1024
    $region21: #{tpu_custom_call.1} parent=1 // pred_fallthru
      _
    %v42 = vld [vmem:[#allocation2] sm:$0xf]
    %v43 = vld [vmem:[#allocation5] sm:$0xf]
    %v44 = vld [vmem:[#allocation5 + $0x4] sm:$0xf]
    %v45 = vld [vmem:[#allocation5 + $0x8] sm:$0xf]
    %v46 = vld [vmem:[#allocation5 + $0xc] sm:$0xf]
    %v47 = vld [vmem:[#allocation5 + $0x10] sm:$0xf]
    %v48 = vld [vmem:[#allocation5 + $0x14] sm:$0xf]
    %v49 = vld [vmem:[#allocation5 + $0x18] sm:$0xf]
    %v50 = vld [vmem:[#allocation5 + $0x1c] sm:$0xf]
    %v51 = vld [vmem:[#allocation5 + $0x20] sm:$0xf]
    %v52 = vld [vmem:[#allocation5 + $0x24] sm:$0xf]
    %v53 = vld [vmem:[#allocation5 + $0x28] sm:$0xf]
    %v54 = vld [vmem:[#allocation5 + $0x2c] sm:$0xf]
    %v55 = vld [vmem:[#allocation5 + $0x30] sm:$0xf]
    %v56 = vld [vmem:[#allocation5 + $0x34] sm:$0xf]
    %v57 = vld [vmem:[#allocation5 + $0x38] sm:$0xf]
    %v58 = vld [vmem:[#allocation5 + $0x3c] sm:$0xf]
    %v59 = vld [vmem:[%s2] sm:$0x1]
    %v61 = vlaneseq
    %v62 = vshrl.u32 %v61, 7
    %v63 = vsub.s32 0, %v62
    %v64 = vrot.slane %v59, %v63
    %v82 = vunpack.c.l.b16 %v43
    %v83 = vunpack.c.l.b16 %v44
    %v84 = vunpack.c.l.b16 %v45
    %v85 = vunpack.c.l.b16 %v46
    %v86 = vunpack.c.l.b16 %v47
    %v87 = vunpack.c.l.b16 %v48
    %v88 = vunpack.c.l.b16 %v49
    %v89 = vunpack.c.l.b16 %v50
    %v90 = vunpack.c.l.b16 %v51
    %v91 = vunpack.c.l.b16 %v52
    %v92 = vunpack.c.l.b16 %v53
    %v93 = vunpack.c.l.b16 %v54
    %v94 = vunpack.c.l.b16 %v55
    %v95 = vunpack.c.l.b16 %v56
    %v96 = vunpack.c.l.b16 %v57
    %v97 = vunpack.c.l.b16 %v58
    %v98 = vpack.c.b16 %v83, %v82
    %v99 = vpack.c.b16 %v85, %v84
    %v100 = vpack.c.b16 %v87, %v86
    %v101 = vpack.c.b16 %v89, %v88
    %v102 = vpack.c.b16 %v91, %v90
    %v103 = vpack.c.b16 %v93, %v92
    %v104 = vpack.c.b16 %v95, %v94
    %v105 = vpack.c.b16 %v97, %v96
    %114 = vmatprep.subr.bf16.mxu0 0
    %115 = vmatpush1.bf16.msra.mxu0 %v98
    %116 = vmatprep.subr.bf16.mxu0 0
    %117 = vmatpush1.bf16.msra.mxu0 %v99
    %118 = vmatprep.subr.bf16.mxu0 0
    %119 = vmatpush1.bf16.msra.mxu0 %v100
    %120 = vmatprep.subr.bf16.mxu0 0
    %121 = vmatpush1.bf16.msra.mxu0 %v101
    %122 = vmatprep.subr.bf16.mxu0 0
    %123 = vmatpush1.bf16.msra.mxu0 %v102
    %124 = vmatprep.subr.bf16.mxu0 0
    %125 = vmatpush1.bf16.msra.mxu0 %v103
    %126 = vmatprep.subr.bf16.mxu0 0
    %127 = vmatpush1.bf16.msra.mxu0 %v104
    %128 = vmatprep.subr.bf16.mxu0 0
    %129 = vmatpush1.bf16.msra.mxu0 %v105
    %130 = vmatprep.subr.bf16.mxu0 0
    %131 = vmatpush1.bf16.msra.mxu0 0
    %132 = vmatprep.subr.bf16.mxu0 0
    %133 = vmatpush1.bf16.msra.mxu0 0
    %134 = vmatprep.subr.bf16.mxu0 0
    %135 = vmatpush1.bf16.msra.mxu0 0
    %136 = vmatprep.subr.bf16.mxu0 0
    %137 = vmatpush1.bf16.msra.mxu0 0
    %138 = vmatprep.subr.bf16.mxu0 0
    %139 = vmatpush1.bf16.msra.mxu0 0
    %140 = vmatprep.subr.bf16.mxu0 0
    %141 = vmatpush1.bf16.msra.mxu0 0
    %142 = vmatprep.subr.bf16.mxu0 0
    %143 = vmatpush1.bf16.msra.mxu0 0
    %144 = vmatprep.subr.bf16.mxu0 0
    %145 = vmatpush1.bf16.msra.mxu0 0
    %146 = vmatprep.mubr.bf16.mxu0 0
    %147 = vmatmul.mubr.bf16.gmra.mrb[0].mxu0 %v42
    %v148 = vpop.f32.mrb[0].mxu0
    %v149 = vadd.f32 %v64, %v148
    %v150 = vpop.f32.mrb[0].mxu0
    %v151 = vpop.f32.mrb[0].mxu0
    %v152 = vpop.f32.mrb[0].mxu0
    %153 = vdwg.mxu0
    %154 = vst [vmem:[#allocation7] sm:$0xff] %v149
    // Predicated region
    $region22: #{tpu_custom_call.1} parent=1 // pred_check
      _
    $region23: #{tpu_custom_call.1} parent=1 // pred_check_branch
      %156 = sbr.rel (0) target = $region25
    $region24: #{tpu_custom_call.1} parent=1 // pred_region
      %s158 = ssub.s32 128, 128
      %159 = vsyncadd [#allocation4], %s158
      %s161 = sshll.u32 [#allocation7], 4
      %s162 = int_to_ptr.vmem [resolvable:$true] %s161
      %164 = dma.vmem_to_hbm [thread:$0]  %s162, 128, %s3, [#allocation4]
    $region25: #{tpu_custom_call.1} parent=1 // pred_fallthru
      _
    // Predicated region
    $region26: #{tpu_custom_call.1} parent=1 // pred_check
      _
    $region27: #{tpu_custom_call.1} parent=1 // pred_check_branch
      %166 = sbr.rel (0) target = $region29
    $region28: #{tpu_custom_call.1} parent=1 // pred_region
      %167 = dma.done [#allocation4], 128
    $region29: #{tpu_custom_call.1} parent=1 // pred_fallthru
      _
    %168 = vsyncpa [#allocation3], 1
    %169 = vsyncpa [#allocation6], 1
    %170 = vsyncpa [#allocation4], 1

</llo_original>
